<compile_context>
chip_gen: v5e
topology: v5e:2x2
jax: 0.10.0
libtpu: 0.0.40
codegen_flags: <defaults>
</compile_context>

<pallas_src>
import functools

import jax
import jax.numpy as jnp
from jax.experimental import pallas as pl
from jax.experimental.pallas import tpu as pltpu

EPS = 1e-5                      # PyTorch LayerNorm default
_INV_SQRT_EPS = 1.0 / (EPS ** 0.5)


def _encoder_layer_kernel(x_ref, w1_ref, b1_ref, w2b_ref, b2_ref, g2_ref, b2n_ref,
                          o_ref, *, ff, d_model, p_pack):
    xp = x_ref[...].astype(jnp.float32)                  # (TM, P) packed input rows
    tm = xp.shape[0]
    L = o_ref.shape[-1]                                  # P * d_model (lane-dense)

    # ---- norm1: LayerNorm over a size-1 axis acts per element: mean == x, var == 0 ----
    # (the packed axis P holds P independent rows; LayerNorm(1) never mixes them)
    mu1 = xp
    xn = (xp - mu1) * _INV_SQRT_EPS                      # == 0; keeps the src data path
    # norm1's affine (g1, b1n) is folded into w1_ref / b1_ref on the host.

    w1 = w1_ref[...]                                     # (1, FF)    == g1 * W1
    b1 = b1_ref[...]                                     # (1, FF)    == b1n * W1 + b1
    w2b = w2b_ref[...]                                   # (P*FF, L)  block-diag(W2)

    # ---- linear1 (1->FF) + relu + linear2 (FF->d_model), one packed group at a time ----
    z = jnp.zeros((tm, L), jnp.float32)
    for p in range(p_pack):
        h = jnp.maximum(xn[:, p:p + 1] * w1 + b1, 0.0)   # (TM, FF)
        # TODO(synk): dropout / dropout1 / dropout2 are identity at inference.
        z = z + jnp.dot(h, w2b[p * ff:(p + 1) * ff, :],
                        preferred_element_type=jnp.float32)   # lands in lanes [p*D,(p+1)*D)
    z = z + b2_ref[...]                                  # (TM, L)

    # ---- norm2: LayerNorm over each d_model-wide lane group (exact f32 reductions) ----
    lane = jax.lax.broadcasted_iota(jnp.int32, (tm, L), 1)
    inv_d = 1.0 / d_model

    mu = jnp.zeros_like(z)
    for p in range(p_pack):
        m = (lane >= p * d_model) & (lane < (p + 1) * d_model)
        mu = mu + jnp.where(m, jnp.sum(jnp.where(m, z, 0.0), axis=-1, keepdims=True), 0.0)
    mu = mu * inv_d
    zc = z - mu

    var = jnp.zeros_like(z)
    for p in range(p_pack):
        m = (lane >= p * d_model) & (lane < (p + 1) * d_model)
        var = var + jnp.where(m, jnp.sum(jnp.where(m, zc * zc, 0.0), axis=-1, keepdims=True), 0.0)
    var = var * inv_d

    o = zc / jnp.sqrt(var + EPS) * g2_ref[...] + b2n_ref[...]
    o_ref[...] = o.astype(o_ref.dtype)


@functools.partial(jax.jit, static_argnames=("tm",))
def transformer_first_encoder_layer(src, params, *, tm=1024):
    """src: (B, S, 1) float32 -> (B, S, d_model) float32."""
    g1, b1n, w1, b1 = params["g1"], params["b1n"], params["w1"], params["b1"]
    w2, b2, g2, b2n = params["w2"], params["b2"], params["g2"], params["b2n"]

    B, S, _ = src.shape
    FF = w1.shape[1]
    D = w2.shape[1]
    N = B * S

    # lane-packing factor: pack P original rows of d_model outputs per 128-lane row
    P = 128 // D if (D < 128 and 128 % D == 0) else 1
    L = P * D

    rows = -(-N // P)                              # packed rows needed
    TM = min(tm, ((rows + 7) // 8) * 8)
    TM = ((TM + 7) // 8) * 8                       # sublane-aligned tile
    Np = -(-rows // TM) * TM                       # pad packed rows to a multiple of TM
    pad = Np * P - N

    x_flat = jnp.pad(src.reshape(N), (0, pad))
    x_packed = x_flat.reshape(Np, P)

    # fold norm1's affine into linear1 (drops the scalar g1/b1n parameter streams)
    w1_eff = (g1.reshape(()) * w1.reshape(1, FF)).astype(jnp.float32)
    b1_eff = (b1n.reshape(()) * w1.reshape(1, FF) + b1.reshape(1, FF)).astype(jnp.float32)
    # block-diagonal linear2 weight: group p of a packed row uses columns [p*D, (p+1)*D)
    w2_block = jnp.kron(jnp.eye(P, dtype=jnp.float32), w2.astype(jnp.float32))   # (P*FF, L)
    b2_t = jnp.tile(b2.reshape(1, D), (1, P))
    g2_t = jnp.tile(g2.reshape(1, D), (1, P))
    b2n_t = jnp.tile(b2n.reshape(1, D), (1, P))

    kernel = functools.partial(_encoder_layer_kernel, ff=FF, d_model=D, p_pack=P)

    out_packed = pl.pallas_call(
        kernel,
        out_shape=jax.ShapeDtypeStruct((Np, L), src.dtype),
        grid_spec=pltpu.PrefetchScalarGridSpec(
            num_scalar_prefetch=0,
            grid=(Np // TM,),
            in_specs=[
                pl.BlockSpec((TM, P), lambda i: (i, 0)),      # packed input rows
                pl.BlockSpec((1, FF), lambda i: (0, 0)),      # W1_eff (norm1 folded in)
                pl.BlockSpec((1, FF), lambda i: (0, 0)),      # b1_eff
                pl.BlockSpec((P * FF, L), lambda i: (0, 0)),  # block-diag W2
                pl.BlockSpec((1, L), lambda i: (0, 0)),       # b2 (tiled per group)
                pl.BlockSpec((1, L), lambda i: (0, 0)),       # norm2 gamma (tiled)
                pl.BlockSpec((1, L), lambda i: (0, 0)),       # norm2 beta (tiled)
            ],
            out_specs=pl.BlockSpec((TM, L), lambda i: (i, 0)),   # lane-dense output
        ),
        compiler_params=pltpu.CompilerParams(
            dimension_semantics=("parallel",),
            vmem_limit_bytes=32 * 1024 * 1024,    # safe on v5e/v6e/v7x; usage is a few MiB
        ),
    )(x_packed, w1_eff, b1_eff, w2_block, b2_t, g2_t, b2n_t)

    # free row-major unpack (Np, P*D) -> (Np*P, D), drop row padding
    out = out_packed.reshape(Np * P, D)[:N]
    return out.reshape(B, S, D)


def _reference(src, params):
    """Pure-JAX reference mirroring the PyTorch forward (dropout = identity)."""
    g1, b1n, w1, b1 = params["g1"], params["b1n"], params["w1"], params["b1"]
    w2, b2, g2, b2n = params["w2"], params["b2"], params["g2"], params["b2n"]
    x = src
    mu1 = jnp.mean(x, axis=-1, keepdims=True)
    var1 = jnp.mean((x - mu1) ** 2, axis=-1, keepdims=True)
    y = (x - mu1) / jnp.sqrt(var1 + EPS) * g1.reshape(1,) + b1n.reshape(1,)
    h = jnp.maximum(y @ w1 + b1.reshape(-1), 0.0)
    z = h @ w2 + b2.reshape(-1)
    mu2 = jnp.mean(z, axis=-1, keepdims=True)
    var2 = jnp.mean((z - mu2) ** 2, axis=-1, keepdims=True)
    return (z - mu2) / jnp.sqrt(var2 + EPS) * g2.reshape(-1) + b2n.reshape(-1)


def init_params(key, d_model, dim_feedforward):
    """Deterministic synthetic parameters (shapes per module __init__)."""
    ks = jax.random.split(key, 6)
    scale1 = 1.0  # Linear(1, FF): fan_in = 1
    scale2 = 1.0 / jnp.sqrt(jnp.float32(dim_feedforward))
    return {
        # LayerNorm(1): nonzero affine so the path is non-trivial
        "g1":  jax.random.normal(ks[0], (1, 1), jnp.float32),
        "b1n": jax.random.normal(ks[1], (1, 1), jnp.float32),
        # Linear(1, FF) stored transposed: (in=1, out=FF)
        "w1":  jax.random.normal(ks[2], (1, dim_feedforward), jnp.float32) * scale1,
        "b1":  jax.random.normal(ks[3], (1, dim_feedforward), jnp.float32) * scale1,
        # Linear(FF, d_model) stored transposed: (in=FF, out=d_model)
        "w2":  jax.random.normal(ks[4], (dim_feedforward, d_model), jnp.float32) * scale2,
        "b2":  jax.random.normal(ks[5], (1, d_model), jnp.float32) * scale2,
        # LayerNorm(d_model)
        "g2":  jnp.ones((1, d_model), jnp.float32),
        "b2n": jnp.zeros((1, d_model), jnp.float32),
    }


if __name__ == "__main__":
    B, S = 2, 8          # batch, sequence
    D_MODEL = 32
    DIM_FF = 64

    key = jax.random.PRNGKey(0)
    k_x, k_p = jax.random.split(key)
    src = jax.random.normal(k_x, (B, S, 1), jnp.float32)
    params = init_params(k_p, D_MODEL, DIM_FF)

    out = transformer_first_encoder_layer(src, params, tm=1024)
    out = jax.block_until_ready(out)

    ref = _reference(src, params)
    assert out.shape == (B, S, D_MODEL), out.shape
    err = float(jnp.max(jnp.abs(out - ref)))
    # tolerance covers possible differences in f32-matmul pass decomposition between the
    # Mosaic kernel and XLA's reference dot across TPU generations; outputs are O(1).
    assert jnp.allclose(out, ref, atol=5e-3, rtol=5e-3), err

    print("KERNEL_OK")
</pallas_src>

<mosaic_0001>
module attributes {stable_mosaic.version = 11 : i64} {
  func.func @_encoder_layer_kernel(%arg0: i32, %arg1: memref<8x4xf32, #tpu.memory_space<vmem>>, %arg2: memref<1x64xf32, #tpu.memory_space<vmem>>, %arg3: memref<1x64xf32, #tpu.memory_space<vmem>>, %arg4: memref<256x128xf32, #tpu.memory_space<vmem>>, %arg5: memref<1x128xf32, #tpu.memory_space<vmem>>, %arg6: memref<1x128xf32, #tpu.memory_space<vmem>>, %arg7: memref<1x128xf32, #tpu.memory_space<vmem>>, %arg8: memref<8x128xf32, #tpu.memory_space<vmem>>) attributes {dimension_semantics = [#tpu.dimension_semantics<parallel>], iteration_bounds = array<i64: 1>, scalar_prefetch = 0 : i64, scratch_operands = 0 : i64, tpu.core_type = #tpu.core_type<tc>, window_params = [{transform_indices = @transform_0, window_bounds = array<i64: 8, 4>}, {pipeline_mode = #tpu.pipeline_mode<synchronous>, transform_indices = @transform_1, window_bounds = array<i64: 1, 64>}, {pipeline_mode = #tpu.pipeline_mode<synchronous>, transform_indices = @transform_2, window_bounds = array<i64: 1, 64>}, {pipeline_mode = #tpu.pipeline_mode<synchronous>, transform_indices = @transform_3, window_bounds = array<i64: 256, 128>}, {pipeline_mode = #tpu.pipeline_mode<synchronous>, transform_indices = @transform_4, window_bounds = array<i64: 1, 128>}, {pipeline_mode = #tpu.pipeline_mode<synchronous>, transform_indices = @transform_5, window_bounds = array<i64: 1, 128>}, {pipeline_mode = #tpu.pipeline_mode<synchronous>, transform_indices = @transform_6, window_bounds = array<i64: 1, 128>}, {transform_indices = @transform_7, window_bounds = array<i64: 8, 128>}]} {
    %c0 = arith.constant 0 : index
    %c0_0 = arith.constant 0 : index
    %0 = vector.load %arg1[%c0, %c0_0] : memref<8x4xf32, #tpu.memory_space<vmem>>, vector<8x4xf32>
    %1 = arith.subf %0, %0 : vector<8x4xf32>
    %cst = arith.constant 316.227753 : f32
    %2 = vector.broadcast %cst : f32 to vector<8x4xf32>
    %3 = arith.mulf %1, %2 : vector<8x4xf32>
    %c0_1 = arith.constant 0 : index
    %c0_2 = arith.constant 0 : index
    %4 = vector.load %arg2[%c0_1, %c0_2] : memref<1x64xf32, #tpu.memory_space<vmem>>, vector<1x64xf32>
    %c0_3 = arith.constant 0 : index
    %c0_4 = arith.constant 0 : index
    %5 = vector.load %arg3[%c0_3, %c0_4] : memref<1x64xf32, #tpu.memory_space<vmem>>, vector<1x64xf32>
    %c0_5 = arith.constant 0 : index
    %c0_6 = arith.constant 0 : index
    %6 = vector.load %arg4[%c0_5, %c0_6] : memref<256x128xf32, #tpu.memory_space<vmem>>, vector<256x128xf32>
    %cst_7 = arith.constant 0.000000e+00 : f32
    %7 = vector.broadcast %cst_7 : f32 to vector<8x128xf32>
    %8 = vector.extract_strided_slice %3 {offsets = [0, 0], sizes = [8, 1], strides = [1, 1]} : vector<8x4xf32> to vector<8x1xf32>
    %9 = vector.broadcast %8 : vector<8x1xf32> to vector<8x64xf32>
    %10 = vector.broadcast %4 : vector<1x64xf32> to vector<8x64xf32>
    %11 = arith.mulf %9, %10 : vector<8x64xf32>
    %12 = vector.broadcast %5 : vector<1x64xf32> to vector<8x64xf32>
    %13 = arith.addf %11, %12 : vector<8x64xf32>
    %cst_8 = arith.constant 0.000000e+00 : f32
    %14 = vector.broadcast %cst_8 : f32 to vector<8x64xf32>
    %15 = arith.maximumf %13, %14 : vector<8x64xf32>
    %16 = vector.extract_strided_slice %6 {offsets = [0, 0], sizes = [64, 128], strides = [1, 1]} : vector<256x128xf32> to vector<64x128xf32>
    %cst_9 = arith.constant dense<0.000000e+00> : vector<8x128xf32>
    %17 = tpu.matmul %15, %16, %cst_9 {dimension_numbers = #tpu.dot_dimension_numbers<[1], [0], [0], [1], [0, 0, 1, 1], [], []>} : vector<8x64xf32>, vector<64x128xf32>, vector<8x128xf32> -> vector<8x128xf32>
    %18 = arith.addf %7, %17 : vector<8x128xf32>
    %19 = vector.extract_strided_slice %3 {offsets = [0, 1], sizes = [8, 1], strides = [1, 1]} : vector<8x4xf32> to vector<8x1xf32>
    %20 = vector.broadcast %19 : vector<8x1xf32> to vector<8x64xf32>
    %21 = vector.broadcast %4 : vector<1x64xf32> to vector<8x64xf32>
    %22 = arith.mulf %20, %21 : vector<8x64xf32>
    %23 = vector.broadcast %5 : vector<1x64xf32> to vector<8x64xf32>
    %24 = arith.addf %22, %23 : vector<8x64xf32>
    %cst_10 = arith.constant 0.000000e+00 : f32
    %25 = vector.broadcast %cst_10 : f32 to vector<8x64xf32>
    %26 = arith.maximumf %24, %25 : vector<8x64xf32>
    %27 = vector.extract_strided_slice %6 {offsets = [64, 0], sizes = [64, 128], strides = [1, 1]} : vector<256x128xf32> to vector<64x128xf32>
    %cst_11 = arith.constant dense<0.000000e+00> : vector<8x128xf32>
    %28 = tpu.matmul %26, %27, %cst_11 {dimension_numbers = #tpu.dot_dimension_numbers<[1], [0], [0], [1], [0, 0, 1, 1], [], []>} : vector<8x64xf32>, vector<64x128xf32>, vector<8x128xf32> -> vector<8x128xf32>
    %29 = arith.addf %18, %28 : vector<8x128xf32>
    %30 = vector.extract_strided_slice %3 {offsets = [0, 2], sizes = [8, 1], strides = [1, 1]} : vector<8x4xf32> to vector<8x1xf32>
    %31 = vector.broadcast %30 : vector<8x1xf32> to vector<8x64xf32>
    %32 = vector.broadcast %4 : vector<1x64xf32> to vector<8x64xf32>
    %33 = arith.mulf %31, %32 : vector<8x64xf32>
    %34 = vector.broadcast %5 : vector<1x64xf32> to vector<8x64xf32>
    %35 = arith.addf %33, %34 : vector<8x64xf32>
    %cst_12 = arith.constant 0.000000e+00 : f32
    %36 = vector.broadcast %cst_12 : f32 to vector<8x64xf32>
    %37 = arith.maximumf %35, %36 : vector<8x64xf32>
    %38 = vector.extract_strided_slice %6 {offsets = [128, 0], sizes = [64, 128], strides = [1, 1]} : vector<256x128xf32> to vector<64x128xf32>
    %cst_13 = arith.constant dense<0.000000e+00> : vector<8x128xf32>
    %39 = tpu.matmul %37, %38, %cst_13 {dimension_numbers = #tpu.dot_dimension_numbers<[1], [0], [0], [1], [0, 0, 1, 1], [], []>} : vector<8x64xf32>, vector<64x128xf32>, vector<8x128xf32> -> vector<8x128xf32>
    %40 = arith.addf %29, %39 : vector<8x128xf32>
    %41 = vector.extract_strided_slice %3 {offsets = [0, 3], sizes = [8, 1], strides = [1, 1]} : vector<8x4xf32> to vector<8x1xf32>
    %42 = vector.broadcast %41 : vector<8x1xf32> to vector<8x64xf32>
    %43 = vector.broadcast %4 : vector<1x64xf32> to vector<8x64xf32>
    %44 = arith.mulf %42, %43 : vector<8x64xf32>
    %45 = vector.broadcast %5 : vector<1x64xf32> to vector<8x64xf32>
    %46 = arith.addf %44, %45 : vector<8x64xf32>
    %cst_14 = arith.constant 0.000000e+00 : f32
    %47 = vector.broadcast %cst_14 : f32 to vector<8x64xf32>
    %48 = arith.maximumf %46, %47 : vector<8x64xf32>
    %49 = vector.extract_strided_slice %6 {offsets = [192, 0], sizes = [64, 128], strides = [1, 1]} : vector<256x128xf32> to vector<64x128xf32>
    %cst_15 = arith.constant dense<0.000000e+00> : vector<8x128xf32>
    %50 = tpu.matmul %48, %49, %cst_15 {dimension_numbers = #tpu.dot_dimension_numbers<[1], [0], [0], [1], [0, 0, 1, 1], [], []>} : vector<8x64xf32>, vector<64x128xf32>, vector<8x128xf32> -> vector<8x128xf32>
    %51 = arith.addf %40, %50 : vector<8x128xf32>
    %c0_16 = arith.constant 0 : index
    %c0_17 = arith.constant 0 : index
    %52 = vector.load %arg5[%c0_16, %c0_17] : memref<1x128xf32, #tpu.memory_space<vmem>>, vector<1x128xf32>
    %53 = vector.broadcast %52 : vector<1x128xf32> to vector<8x128xf32>
    %54 = arith.addf %51, %53 : vector<8x128xf32>
    %55 = tpu.iota {dimensions = array<i32: 1>} : vector<8x128xi32>
    %cst_18 = arith.constant 0.000000e+00 : f32
    %56 = vector.broadcast %cst_18 : f32 to vector<8x128xf32>
    %c0_i32 = arith.constant 0 : i32
    %57 = vector.broadcast %c0_i32 : i32 to vector<8x128xi32>
    %58 = arith.cmpi sge, %55, %57 : vector<8x128xi32>
    %c32_i32 = arith.constant 32 : i32
    %59 = vector.broadcast %c32_i32 : i32 to vector<8x128xi32>
    %60 = arith.cmpi slt, %55, %59 : vector<8x128xi32>
    %61 = arith.andi %58, %60 : vector<8x128xi1>
    %cst_19 = arith.constant 0.000000e+00 : f32
    %62 = vector.broadcast %cst_19 : f32 to vector<8x128xf32>
    %63 = arith.select %61, %54, %62 : vector<8x128xi1>, vector<8x128xf32>
    %cst_20 = arith.constant dense<0.000000e+00> : vector<8xf32>
    %64 = vector.multi_reduction <add>, %63, %cst_20 [1] : vector<8x128xf32> to vector<8xf32>
    %65 = vector.shape_cast %64 : vector<8xf32> to vector<8x1xf32>
    %cst_21 = arith.constant 0.000000e+00 : f32
    %66 = vector.shape_cast %65 : vector<8x1xf32> to vector<8x1xf32>
    %67 = vector.broadcast %66 : vector<8x1xf32> to vector<8x128xf32>
    %68 = vector.broadcast %cst_21 : f32 to vector<8x128xf32>
    %69 = arith.select %61, %67, %68 : vector<8x128xi1>, vector<8x128xf32>
    %70 = arith.addf %56, %69 : vector<8x128xf32>
    %c32_i32_22 = arith.constant 32 : i32
    %71 = vector.broadcast %c32_i32_22 : i32 to vector<8x128xi32>
    %72 = arith.cmpi sge, %55, %71 : vector<8x128xi32>
    %c64_i32 = arith.constant 64 : i32
    %73 = vector.broadcast %c64_i32 : i32 to vector<8x128xi32>
    %74 = arith.cmpi slt, %55, %73 : vector<8x128xi32>
    %75 = arith.andi %72, %74 : vector<8x128xi1>
    %cst_23 = arith.constant 0.000000e+00 : f32
    %76 = vector.broadcast %cst_23 : f32 to vector<8x128xf32>
    %77 = arith.select %75, %54, %76 : vector<8x128xi1>, vector<8x128xf32>
    %cst_24 = arith.constant dense<0.000000e+00> : vector<8xf32>
    %78 = vector.multi_reduction <add>, %77, %cst_24 [1] : vector<8x128xf32> to vector<8xf32>
    %79 = vector.shape_cast %78 : vector<8xf32> to vector<8x1xf32>
    %cst_25 = arith.constant 0.000000e+00 : f32
    %80 = vector.shape_cast %79 : vector<8x1xf32> to vector<8x1xf32>
    %81 = vector.broadcast %80 : vector<8x1xf32> to vector<8x128xf32>
    %82 = vector.broadcast %cst_25 : f32 to vector<8x128xf32>
    %83 = arith.select %75, %81, %82 : vector<8x128xi1>, vector<8x128xf32>
    %84 = arith.addf %70, %83 : vector<8x128xf32>
    %c64_i32_26 = arith.constant 64 : i32
    %85 = vector.broadcast %c64_i32_26 : i32 to vector<8x128xi32>
    %86 = arith.cmpi sge, %55, %85 : vector<8x128xi32>
    %c96_i32 = arith.constant 96 : i32
    %87 = vector.broadcast %c96_i32 : i32 to vector<8x128xi32>
    %88 = arith.cmpi slt, %55, %87 : vector<8x128xi32>
    %89 = arith.andi %86, %88 : vector<8x128xi1>
    %cst_27 = arith.constant 0.000000e+00 : f32
    %90 = vector.broadcast %cst_27 : f32 to vector<8x128xf32>
    %91 = arith.select %89, %54, %90 : vector<8x128xi1>, vector<8x128xf32>
    %cst_28 = arith.constant dense<0.000000e+00> : vector<8xf32>
    %92 = vector.multi_reduction <add>, %91, %cst_28 [1] : vector<8x128xf32> to vector<8xf32>
    %93 = vector.shape_cast %92 : vector<8xf32> to vector<8x1xf32>
    %cst_29 = arith.constant 0.000000e+00 : f32
    %94 = vector.shape_cast %93 : vector<8x1xf32> to vector<8x1xf32>
    %95 = vector.broadcast %94 : vector<8x1xf32> to vector<8x128xf32>
    %96 = vector.broadcast %cst_29 : f32 to vector<8x128xf32>
    %97 = arith.select %89, %95, %96 : vector<8x128xi1>, vector<8x128xf32>
    %98 = arith.addf %84, %97 : vector<8x128xf32>
    %c96_i32_30 = arith.constant 96 : i32
    %99 = vector.broadcast %c96_i32_30 : i32 to vector<8x128xi32>
    %100 = arith.cmpi sge, %55, %99 : vector<8x128xi32>
    %c128_i32 = arith.constant 128 : i32
    %101 = vector.broadcast %c128_i32 : i32 to vector<8x128xi32>
    %102 = arith.cmpi slt, %55, %101 : vector<8x128xi32>
    %103 = arith.andi %100, %102 : vector<8x128xi1>
    %cst_31 = arith.constant 0.000000e+00 : f32
    %104 = vector.broadcast %cst_31 : f32 to vector<8x128xf32>
    %105 = arith.select %103, %54, %104 : vector<8x128xi1>, vector<8x128xf32>
    %cst_32 = arith.constant dense<0.000000e+00> : vector<8xf32>
    %106 = vector.multi_reduction <add>, %105, %cst_32 [1] : vector<8x128xf32> to vector<8xf32>
    %107 = vector.shape_cast %106 : vector<8xf32> to vector<8x1xf32>
    %cst_33 = arith.constant 0.000000e+00 : f32
    %108 = vector.shape_cast %107 : vector<8x1xf32> to vector<8x1xf32>
    %109 = vector.broadcast %108 : vector<8x1xf32> to vector<8x128xf32>
    %110 = vector.broadcast %cst_33 : f32 to vector<8x128xf32>
    %111 = arith.select %103, %109, %110 : vector<8x128xi1>, vector<8x128xf32>
    %112 = arith.addf %98, %111 : vector<8x128xf32>
    %cst_34 = arith.constant 3.125000e-02 : f32
    %113 = vector.broadcast %cst_34 : f32 to vector<8x128xf32>
    %114 = arith.mulf %112, %113 : vector<8x128xf32>
    %115 = arith.subf %54, %114 : vector<8x128xf32>
    %cst_35 = arith.constant 0.000000e+00 : f32
    %116 = vector.broadcast %cst_35 : f32 to vector<8x128xf32>
    %c0_i32_36 = arith.constant 0 : i32
    %117 = vector.broadcast %c0_i32_36 : i32 to vector<8x128xi32>
    %118 = arith.cmpi sge, %55, %117 : vector<8x128xi32>
    %c32_i32_37 = arith.constant 32 : i32
    %119 = vector.broadcast %c32_i32_37 : i32 to vector<8x128xi32>
    %120 = arith.cmpi slt, %55, %119 : vector<8x128xi32>
    %121 = arith.andi %118, %120 : vector<8x128xi1>
    %122 = arith.mulf %115, %115 : vector<8x128xf32>
    %cst_38 = arith.constant 0.000000e+00 : f32
    %123 = vector.broadcast %cst_38 : f32 to vector<8x128xf32>
    %124 = arith.select %121, %122, %123 : vector<8x128xi1>, vector<8x128xf32>
    %cst_39 = arith.constant dense<0.000000e+00> : vector<8xf32>
    %125 = vector.multi_reduction <add>, %124, %cst_39 [1] : vector<8x128xf32> to vector<8xf32>
    %126 = vector.shape_cast %125 : vector<8xf32> to vector<8x1xf32>
    %cst_40 = arith.constant 0.000000e+00 : f32
    %127 = vector.shape_cast %126 : vector<8x1xf32> to vector<8x1xf32>
    %128 = vector.broadcast %127 : vector<8x1xf32> to vector<8x128xf32>
    %129 = vector.broadcast %cst_40 : f32 to vector<8x128xf32>
    %130 = arith.select %121, %128, %129 : vector<8x128xi1>, vector<8x128xf32>
    %131 = arith.addf %116, %130 : vector<8x128xf32>
    %c32_i32_41 = arith.constant 32 : i32
    %132 = vector.broadcast %c32_i32_41 : i32 to vector<8x128xi32>
    %133 = arith.cmpi sge, %55, %132 : vector<8x128xi32>
    %c64_i32_42 = arith.constant 64 : i32
    %134 = vector.broadcast %c64_i32_42 : i32 to vector<8x128xi32>
    %135 = arith.cmpi slt, %55, %134 : vector<8x128xi32>
    %136 = arith.andi %133, %135 : vector<8x128xi1>
    %137 = arith.mulf %115, %115 : vector<8x128xf32>
    %cst_43 = arith.constant 0.000000e+00 : f32
    %138 = vector.broadcast %cst_43 : f32 to vector<8x128xf32>
    %139 = arith.select %136, %137, %138 : vector<8x128xi1>, vector<8x128xf32>
    %cst_44 = arith.constant dense<0.000000e+00> : vector<8xf32>
    %140 = vector.multi_reduction <add>, %139, %cst_44 [1] : vector<8x128xf32> to vector<8xf32>
    %141 = vector.shape_cast %140 : vector<8xf32> to vector<8x1xf32>
    %cst_45 = arith.constant 0.000000e+00 : f32
    %142 = vector.shape_cast %141 : vector<8x1xf32> to vector<8x1xf32>
    %143 = vector.broadcast %142 : vector<8x1xf32> to vector<8x128xf32>
    %144 = vector.broadcast %cst_45 : f32 to vector<8x128xf32>
    %145 = arith.select %136, %143, %144 : vector<8x128xi1>, vector<8x128xf32>
    %146 = arith.addf %131, %145 : vector<8x128xf32>
    %c64_i32_46 = arith.constant 64 : i32
    %147 = vector.broadcast %c64_i32_46 : i32 to vector<8x128xi32>
    %148 = arith.cmpi sge, %55, %147 : vector<8x128xi32>
    %c96_i32_47 = arith.constant 96 : i32
    %149 = vector.broadcast %c96_i32_47 : i32 to vector<8x128xi32>
    %150 = arith.cmpi slt, %55, %149 : vector<8x128xi32>
    %151 = arith.andi %148, %150 : vector<8x128xi1>
    %152 = arith.mulf %115, %115 : vector<8x128xf32>
    %cst_48 = arith.constant 0.000000e+00 : f32
    %153 = vector.broadcast %cst_48 : f32 to vector<8x128xf32>
    %154 = arith.select %151, %152, %153 : vector<8x128xi1>, vector<8x128xf32>
    %cst_49 = arith.constant dense<0.000000e+00> : vector<8xf32>
    %155 = vector.multi_reduction <add>, %154, %cst_49 [1] : vector<8x128xf32> to vector<8xf32>
    %156 = vector.shape_cast %155 : vector<8xf32> to vector<8x1xf32>
    %cst_50 = arith.constant 0.000000e+00 : f32
    %157 = vector.shape_cast %156 : vector<8x1xf32> to vector<8x1xf32>
    %158 = vector.broadcast %157 : vector<8x1xf32> to vector<8x128xf32>
    %159 = vector.broadcast %cst_50 : f32 to vector<8x128xf32>
    %160 = arith.select %151, %158, %159 : vector<8x128xi1>, vector<8x128xf32>
    %161 = arith.addf %146, %160 : vector<8x128xf32>
    %c96_i32_51 = arith.constant 96 : i32
    %162 = vector.broadcast %c96_i32_51 : i32 to vector<8x128xi32>
    %163 = arith.cmpi sge, %55, %162 : vector<8x128xi32>
    %c128_i32_52 = arith.constant 128 : i32
    %164 = vector.broadcast %c128_i32_52 : i32 to vector<8x128xi32>
    %165 = arith.cmpi slt, %55, %164 : vector<8x128xi32>
    %166 = arith.andi %163, %165 : vector<8x128xi1>
    %167 = arith.mulf %115, %115 : vector<8x128xf32>
    %cst_53 = arith.constant 0.000000e+00 : f32
    %168 = vector.broadcast %cst_53 : f32 to vector<8x128xf32>
    %169 = arith.select %166, %167, %168 : vector<8x128xi1>, vector<8x128xf32>
    %cst_54 = arith.constant dense<0.000000e+00> : vector<8xf32>
    %170 = vector.multi_reduction <add>, %169, %cst_54 [1] : vector<8x128xf32> to vector<8xf32>
    %171 = vector.shape_cast %170 : vector<8xf32> to vector<8x1xf32>
    %cst_55 = arith.constant 0.000000e+00 : f32
    %172 = vector.shape_cast %171 : vector<8x1xf32> to vector<8x1xf32>
    %173 = vector.broadcast %172 : vector<8x1xf32> to vector<8x128xf32>
    %174 = vector.broadcast %cst_55 : f32 to vector<8x128xf32>
    %175 = arith.select %166, %173, %174 : vector<8x128xi1>, vector<8x128xf32>
    %176 = arith.addf %161, %175 : vector<8x128xf32>
    %cst_56 = arith.constant 3.125000e-02 : f32
    %177 = vector.broadcast %cst_56 : f32 to vector<8x128xf32>
    %178 = arith.mulf %176, %177 : vector<8x128xf32>
    %cst_57 = arith.constant 9.99999974E-6 : f32
    %179 = vector.broadcast %cst_57 : f32 to vector<8x128xf32>
    %180 = arith.addf %178, %179 : vector<8x128xf32>
    %181 = math.sqrt %180 : vector<8x128xf32>
    %182 = arith.divf %115, %181 : vector<8x128xf32>
    %c0_58 = arith.constant 0 : index
    %c0_59 = arith.constant 0 : index
    %183 = vector.load %arg6[%c0_58, %c0_59] : memref<1x128xf32, #tpu.memory_space<vmem>>, vector<1x128xf32>
    %184 = vector.broadcast %183 : vector<1x128xf32> to vector<8x128xf32>
    %185 = arith.mulf %182, %184 : vector<8x128xf32>
    %c0_60 = arith.constant 0 : index
    %c0_61 = arith.constant 0 : index
    %186 = vector.load %arg7[%c0_60, %c0_61] : memref<1x128xf32, #tpu.memory_space<vmem>>, vector<1x128xf32>
    %187 = vector.broadcast %186 : vector<1x128xf32> to vector<8x128xf32>
    %188 = arith.addf %185, %187 : vector<8x128xf32>
    %c0_62 = arith.constant 0 : index
    %c0_63 = arith.constant 0 : index
    %189 = vector.load %arg8[%c0_62, %c0_63] : memref<8x128xf32, #tpu.memory_space<vmem>>, vector<8x128xf32>
    tpu.vector_store %arg8[%c0_62, %c0_63], %188 {strides = array<i32>} : memref<8x128xf32, #tpu.memory_space<vmem>>, vector<8x128xf32>,
    return
  }
  func.func @transform_0(%arg0: i32) -> (i32, i32) {
    %c0_i32 = arith.constant 0 : i32
    %c0_i32_0 = arith.constant 0 : i32
    return %arg0, %c0_i32 : i32, i32
  }
  func.func @transform_1(%arg0: i32) -> (i32, i32) {
    %c0_i32 = arith.constant 0 : i32
    %c0_i32_0 = arith.constant 0 : i32
    %c0_i32_1 = arith.constant 0 : i32
    return %c0_i32, %c0_i32_0 : i32, i32
  }
  func.func @transform_2(%arg0: i32) -> (i32, i32) {
    %c0_i32 = arith.constant 0 : i32
    %c0_i32_0 = arith.constant 0 : i32
    %c0_i32_1 = arith.constant 0 : i32
    return %c0_i32, %c0_i32_0 : i32, i32
  }
  func.func @transform_3(%arg0: i32) -> (i32, i32) {
    %c0_i32 = arith.constant 0 : i32
    %c0_i32_0 = arith.constant 0 : i32
    %c0_i32_1 = arith.constant 0 : i32
    return %c0_i32, %c0_i32_0 : i32, i32
  }
  func.func @transform_4(%arg0: i32) -> (i32, i32) {
    %c0_i32 = arith.constant 0 : i32
    %c0_i32_0 = arith.constant 0 : i32
    %c0_i32_1 = arith.constant 0 : i32
    return %c0_i32, %c0_i32_0 : i32, i32
  }
  func.func @transform_5(%arg0: i32) -> (i32, i32) {
    %c0_i32 = arith.constant 0 : i32
    %c0_i32_0 = arith.constant 0 : i32
    %c0_i32_1 = arith.constant 0 : i32
    return %c0_i32, %c0_i32_0 : i32, i32
  }
  func.func @transform_6(%arg0: i32) -> (i32, i32) {
    %c0_i32 = arith.constant 0 : i32
    %c0_i32_0 = arith.constant 0 : i32
    %c0_i32_1 = arith.constant 0 : i32
    return %c0_i32, %c0_i32_0 : i32, i32
  }
  func.func @transform_7(%arg0: i32) -> (i32, i32) {
    %c0_i32 = arith.constant 0 : i32
    %c0_i32_0 = arith.constant 0 : i32
    return %arg0, %c0_i32 : i32, i32
  }
}

</mosaic_0001>

<llo_original>
// kernel: transformer_first_encoder_layer.1
$region0: #{transformer_first_encoder_layer.1}
  #allocation0 [shape = 'u32[]', space=smem, size = 0x4, offset = 0x4, fixed_abs, tag = 'smem constant byte address 0x4 - core index']
  #allocation1 [shape = 'u32[72,128]{1,0:T(1,128)}', space=vmem, size = 0x9000, scoped, tag = 'internal scratch']
  %s0 = inlined_call_operand.vmem [shape: f32[8,4], index: 0, kind: input, shape index: {}]
  %s1 = inlined_call_operand.vmem [shape: f32[1,64], index: 1, kind: input, shape index: {}]
  %s2 = inlined_call_operand.vmem [shape: f32[1,64], index: 2, kind: input, shape index: {}]
  %s3 = inlined_call_operand.vmem [shape: f32[256,128], index: 3, kind: input, shape index: {}]
  %s4 = inlined_call_operand.vmem [shape: f32[1,128], index: 4, kind: input, shape index: {}]
  %s5 = inlined_call_operand.vmem [shape: f32[1,128], index: 5, kind: input, shape index: {}]
  %s6 = inlined_call_operand.vmem [shape: f32[1,128], index: 6, kind: input, shape index: {}]
  %s7 = inlined_call_operand.vmem [shape: f32[8,128], index: 7, kind: output, shape index: {}]
  %s8 = sld [smem:[#allocation0]]
  $region38: #{transformer_first_encoder_layer.1} parent=0
    _
  %s10 = ssub.s32 1, %s8
  %s11 = scalar_select 0, %s10, %s8
  // Predicated region
  $region2: #{transformer_first_encoder_layer.1} parent=0 // pred_check
    _
  $region3: #{transformer_first_encoder_layer.1} parent=0 // pred_check_branch
    %13 = sbr.rel (0) target = $region5
  $region4: #{transformer_first_encoder_layer.1} parent=0 // pred_region
    _
  $region5: #{transformer_first_encoder_layer.1} parent=0 // pred_fallthru
    _
  // Predicated region
  $region6: #{transformer_first_encoder_layer.1} parent=0 // pred_check
    _
  $region7: #{transformer_first_encoder_layer.1} parent=0 // pred_check_branch
    %15 = sbr.rel (0) target = $region9
  $region8: #{transformer_first_encoder_layer.1} parent=0 // pred_region
    _
  $region9: #{transformer_first_encoder_layer.1} parent=0 // pred_fallthru
    _
  // Predicated region
  $region10: #{transformer_first_encoder_layer.1} parent=0 // pred_check
    _
  $region11: #{transformer_first_encoder_layer.1} parent=0 // pred_check_branch
    %17 = sbr.rel (0) target = $region13
  $region12: #{transformer_first_encoder_layer.1} parent=0 // pred_region
    _
  $region13: #{transformer_first_encoder_layer.1} parent=0 // pred_fallthru
    _
  // Predicated region
  $region14: #{transformer_first_encoder_layer.1} parent=0 // pred_check
    _
  $region15: #{transformer_first_encoder_layer.1} parent=0 // pred_check_branch
    %19 = sbr.rel (0) target = $region17
  $region16: #{transformer_first_encoder_layer.1} parent=0 // pred_region
    _
  $region17: #{transformer_first_encoder_layer.1} parent=0 // pred_fallthru
    _
  // Predicated region
  $region18: #{transformer_first_encoder_layer.1} parent=0 // pred_check
    _
  $region19: #{transformer_first_encoder_layer.1} parent=0 // pred_check_branch
    %21 = sbr.rel (0) target = $region21
  $region20: #{transformer_first_encoder_layer.1} parent=0 // pred_region
    _
  $region21: #{transformer_first_encoder_layer.1} parent=0 // pred_fallthru
    _
  // Predicated region
  $region22: #{transformer_first_encoder_layer.1} parent=0 // pred_check
    _
  $region23: #{transformer_first_encoder_layer.1} parent=0 // pred_check_branch
    %23 = sbr.rel (0) target = $region25
  $region24: #{transformer_first_encoder_layer.1} parent=0 // pred_region
    _
  $region25: #{transformer_first_encoder_layer.1} parent=0 // pred_fallthru
    _
  // Predicated region
  $region26: #{transformer_first_encoder_layer.1} parent=0 // pred_check
    _
  $region27: #{transformer_first_encoder_layer.1} parent=0 // pred_check_branch
    %25 = sbr.rel (0) target = $region29
  $region28: #{transformer_first_encoder_layer.1} parent=0 // pred_region
    _
  $region29: #{transformer_first_encoder_layer.1} parent=0 // pred_fallthru
    _
  %v26 = vld [vmem:[%s0] sm:$0xff]
  %v27 = vsub.f32 %v26, %v26
  %v28 = vmul.f32 %v27, 316.22775
  %v29 = vld [vmem:[%s1] sm:$0x1]
  %v30 = vld [vmem:[%s2] sm:$0x1]
  %v31 = vld [vmem:[%s3] sm:$0xff]
  %v32 = vld [vmem:[%s3 + $0x8] sm:$0xff]
  %v33 = vld [vmem:[%s3 + $0x10] sm:$0xff]
  %v34 = vld [vmem:[%s3 + $0x18] sm:$0xff]
  %v35 = vld [vmem:[%s3 + $0x20] sm:$0xff]
  %v36 = vld [vmem:[%s3 + $0x28] sm:$0xff]
  %v37 = vld [vmem:[%s3 + $0x30] sm:$0xff]
  %v38 = vld [vmem:[%s3 + $0x38] sm:$0xff]
  %v39 = vld [vmem:[%s3 + $0x40] sm:$0xff]
  %v40 = vld [vmem:[%s3 + $0x48] sm:$0xff]
  %v41 = vld [vmem:[%s3 + $0x50] sm:$0xff]
  %v42 = vld [vmem:[%s3 + $0x58] sm:$0xff]
  %v43 = vld [vmem:[%s3 + $0x60] sm:$0xff]
  %v44 = vld [vmem:[%s3 + $0x68] sm:$0xff]
  %v45 = vld [vmem:[%s3 + $0x70] sm:$0xff]
  %v46 = vld [vmem:[%s3 + $0x78] sm:$0xff]
  %v47 = vld [vmem:[%s3 + $0x80] sm:$0xff]
  %v48 = vld [vmem:[%s3 + $0x88] sm:$0xff]
  %v49 = vld [vmem:[%s3 + $0x90] sm:$0xff]
  %v50 = vld [vmem:[%s3 + $0x98] sm:$0xff]
  %v51 = vld [vmem:[%s3 + $0xa0] sm:$0xff]
  %v52 = vld [vmem:[%s3 + $0xa8] sm:$0xff]
  %v53 = vld [vmem:[%s3 + $0xb0] sm:$0xff]
  %v54 = vld [vmem:[%s3 + $0xb8] sm:$0xff]
  %v55 = vld [vmem:[%s3 + $0xc0] sm:$0xff]
  %v56 = vld [vmem:[%s3 + $0xc8] sm:$0xff]
  %v57 = vld [vmem:[%s3 + $0xd0] sm:$0xff]
  %v58 = vld [vmem:[%s3 + $0xd8] sm:$0xff]
  %v59 = vld [vmem:[%s3 + $0xe0] sm:$0xff]
  %v60 = vld [vmem:[%s3 + $0xe8] sm:$0xff]
  %v61 = vld [vmem:[%s3 + $0xf0] sm:$0xff]
  %v62 = vld [vmem:[%s3 + $0xf8] sm:$0xff]
  %64 = vset.pattern.permute.xlu0 0
  %65 = vperm.xlu0 %64, %v28
  %v66 = vpop.permute.xlu0 %65
  %v69 = vperm.slane %v29, 0
  %v71 = vmul.f32 %v66, %v69
  %v73 = vperm.slane %v30, 0
  %v75 = vadd.f32 %v71, %v73
  %v76 = vmax.f32 %v75, 0.0
  %77 = vset.pattern.permute.xlu0 1
  %78 = vperm.xlu0 %77, %v28
  %v79 = vpop.permute.xlu0 %78
  %v81 = vmul.f32 %v79, %v69
  %v82 = vadd.f32 %v81, %v73
  %v83 = vmax.f32 %v82, 0.0
  %vm84 = vcmask 523264
  %v86 = vsel %vm84, %v83, 0
  %88 = vmatpush.msra.mxu0 0.0
  %89 = vmatpush.msra.mxu0 0.0
  %90 = vmatpush.msra.mxu0 0.0
  %91 = vmatpush.msra.mxu0 0.0
  %92 = vmatpush.msra.mxu0 0.0
  %93 = vmatpush.msra.mxu0 0.0
  %94 = vmatpush.msra.mxu0 0.0
  %95 = vmatpush.msra.mxu0 0.0
  %96 = vmatpush.msra.mxu0 %v46
  %97 = vmatpush.msra.mxu0 %v45
  %98 = vmatpush.msra.mxu0 %v44
  %99 = vmatpush.msra.mxu0 %v43
  %100 = vmatpush.msra.mxu0 %v42
  %101 = vmatpush.msra.mxu0 %v41
  %102 = vmatpush.msra.mxu0 %v40
  %103 = vmatpush.msra.mxu0 %v39
  %104 = vmatmul.f32.gmra.mxu0 %v86
  %v105 = vpop.f32.mrf.mxu0
  %v106 = vadd.f32 0.0, %v105
  %107 = vdwg.mxu0
  %v109 = vsel %vm84, %v76, 0
  %111 = vmatpush.msra.mxu0 0.0
  %112 = vmatpush.msra.mxu0 0.0
  %113 = vmatpush.msra.mxu0 0.0
  %114 = vmatpush.msra.mxu0 0.0
  %115 = vmatpush.msra.mxu0 0.0
  %116 = vmatpush.msra.mxu0 0.0
  %117 = vmatpush.msra.mxu0 0.0
  %118 = vmatpush.msra.mxu0 0.0
  %119 = vmatpush.msra.mxu0 %v38
  %120 = vmatpush.msra.mxu0 %v37
  %121 = vmatpush.msra.mxu0 %v36
  %122 = vmatpush.msra.mxu0 %v35
  %123 = vmatpush.msra.mxu0 %v34
  %124 = vmatpush.msra.mxu0 %v33
  %125 = vmatpush.msra.mxu0 %v32
  %126 = vmatpush.msra.mxu0 %v31
  %127 = vmatmul.f32.gmra.mxu0 %v109
  %v128 = vpop.f32.mrf.mxu0
  %v129 = vadd.f32 %v106, %v128
  %130 = vdwg.mxu0
  %131 = vset.pattern.permute.xlu0 2
  %132 = vperm.xlu0 %131, %v28
  %v133 = vpop.permute.xlu0 %132
  %v135 = vmul.f32 %v133, %v69
  %v136 = vadd.f32 %v135, %v73
  %v137 = vmax.f32 %v136, 0.0
  %v139 = vsel %vm84, %v137, 0
  %141 = vmatpush.msra.mxu0 0.0
  %142 = vmatpush.msra.mxu0 0.0
  %143 = vmatpush.msra.mxu0 0.0
  %144 = vmatpush.msra.mxu0 0.0
  %145 = vmatpush.msra.mxu0 0.0
  %146 = vmatpush.msra.mxu0 0.0
  %147 = vmatpush.msra.mxu0 0.0
  %148 = vmatpush.msra.mxu0 0.0
  %149 = vmatpush.msra.mxu0 %v54
  %150 = vmatpush.msra.mxu0 %v53
  %151 = vmatpush.msra.mxu0 %v52
  %152 = vmatpush.msra.mxu0 %v51
  %153 = vmatpush.msra.mxu0 %v50
  %154 = vmatpush.msra.mxu0 %v49
  %155 = vmatpush.msra.mxu0 %v48
  %156 = vmatpush.msra.mxu0 %v47
  %157 = vmatmul.f32.gmra.mxu0 %v139
  %v158 = vpop.f32.mrf.mxu0
  %v159 = vadd.f32 0.0, %v158
  %160 = vdwg.mxu0
  %v161 = vadd.f32 %v129, %v159
  %162 = vset.pattern.permute.xlu0 3
  %163 = vperm.xlu0 %162, %v28
  %v164 = vpop.permute.xlu0 %163
  %v166 = vmul.f32 %v164, %v69
  %v167 = vadd.f32 %v166, %v73
  %v168 = vmax.f32 %v167, 0.0
  %v170 = vsel %vm84, %v168, 0
  %172 = vmatpush.msra.mxu0 0.0
  %173 = vmatpush.msra.mxu0 0.0
  %174 = vmatpush.msra.mxu0 0.0
  %175 = vmatpush.msra.mxu0 0.0
  %176 = vmatpush.msra.mxu0 0.0
  %177 = vmatpush.msra.mxu0 0.0
  %178 = vmatpush.msra.mxu0 0.0
  %179 = vmatpush.msra.mxu0 0.0
  %180 = vmatpush.msra.mxu0 %v62
  %181 = vmatpush.msra.mxu0 %v61
  %182 = vmatpush.msra.mxu0 %v60
  %183 = vmatpush.msra.mxu0 %v59
  %184 = vmatpush.msra.mxu0 %v58
  %185 = vmatpush.msra.mxu0 %v57
  %186 = vmatpush.msra.mxu0 %v56
  %187 = vmatpush.msra.mxu0 %v55
  %188 = vmatmul.f32.gmra.mxu0 %v170
  %v189 = vpop.f32.mrf.mxu0
  %v190 = vadd.f32 0.0, %v189
  %191 = vdwg.mxu0
  %v192 = vadd.f32 %v161, %v190
  %v193 = vld [vmem:[%s4] sm:$0x1]
  %v195 = vperm.slane %v193, 0
  %v197 = vadd.f32 %v192, %v195
  %v198 = vlaneseq
  %v199 = vand.u32 %v198, 127
  %vm200 = vcmp.ge.s32.totalorder %v199, 0
  %vm201 = vcmp.lt.s32.totalorder %v199, 32
  %vm202 = vmand %vm200, %vm201
  %v203 = vsel %vm202, %v197, 0.0
  %204 = vadd.xlane.f32.xlu0 %v203
  %v205 = vpop.xlane.xlu0 %204
  %v206 = vsel %vm202, %v205, 0.0
  %v207 = vadd.f32 %v206, 0.0
  %vm208 = vcmp.ge.s32.totalorder %v199, 32
  %vm209 = vcmp.lt.s32.totalorder %v199, 64
  %vm210 = vmand %vm208, %vm209
  %v211 = vsel %vm210, %v197, 0.0
  %212 = vadd.xlane.f32.xlu0 %v211
  %v213 = vpop.xlane.xlu0 %212
  %v214 = vsel %vm210, %v213, 0.0
  %v215 = vadd.f32 %v207, %v214
  %vm216 = vcmp.ge.s32.totalorder %v199, 64
  %vm217 = vcmp.lt.s32.totalorder %v199, 96
  %vm218 = vmand %vm216, %vm217
  %v219 = vsel %vm218, %v197, 0.0
  %220 = vadd.xlane.f32.xlu0 %v219
  %v221 = vpop.xlane.xlu0 %220
  %v222 = vsel %vm218, %v221, 0.0
  %v223 = vadd.f32 %v215, %v222
  %vm224 = vcmp.ge.s32.totalorder %v199, 96
  %vm225 = vcmp.lt.s32.totalorder %v199, 128
  %vm226 = vmand %vm224, %vm225
  %v227 = vsel %vm226, %v197, 0.0
  %228 = vadd.xlane.f32.xlu0 %v227
  %v229 = vpop.xlane.xlu0 %228
  %v230 = vsel %vm226, %v229, 0.0
  %v231 = vadd.f32 %v223, %v230
  %v232 = vmul.f32 %v231, 0.03125
  %v233 = vsub.f32 %v197, %v232
  %v234 = vmul.f32 %v233, %v233
  %v235 = vsel %vm202, %v234, 0.0
  %236 = vadd.xlane.f32.xlu0 %v235
  %v237 = vpop.xlane.xlu0 %236
  %v238 = vsel %vm202, %v237, 0.0
  %v239 = vadd.f32 %v238, 0.0
  %v240 = vsel %vm210, %v234, 0.0
  %241 = vadd.xlane.f32.xlu0 %v240
  %v242 = vpop.xlane.xlu0 %241
  %v243 = vsel %vm210, %v242, 0.0
  %v244 = vadd.f32 %v239, %v243
  %v245 = vsel %vm218, %v234, 0.0
  %246 = vadd.xlane.f32.xlu0 %v245
  %v247 = vpop.xlane.xlu0 %246
  %v248 = vsel %vm218, %v247, 0.0
  %v249 = vadd.f32 %v244, %v248
  %v250 = vsel %vm226, %v234, 0.0
  %251 = vadd.xlane.f32.xlu0 %v250
  %v252 = vpop.xlane.xlu0 %251
  %v253 = vsel %vm226, %v252, 0.0
  %v254 = vadd.f32 %v249, %v253
  %v255 = vmul.f32 %v254, 0.03125
  %v256 = vadd.f32 %v255, 1e-05
  %v257 = vrsqrt.pop %v256
  %v258 = vmul.f32 %v257, %v256
  %v259 = vmul.f32 %v258, %v257
  %v260 = vmul.f32 0.5, %v259
  %v261 = vsub.f32 1.5, %v260
  %v262 = vmul.f32 %v257, %v261
  %v263 = vmul.f32 %v256, %v262
  %vm264 = vcmp.eq.f32.partialorder %v256, inf
  %v265 = vsel %vm264, %v256, %v263
  %vm266 = vcmp.eq.f32.partialorder %v256, 0.0
  %v267 = vand.u32 %v256, 2147483648
  %v268 = vsel %vm266, %v267, %v265
  %v269 = vrcp.pop %v268
  %v270 = vmul.f32 %v268, %v269
  %v271 = vsub.f32 1.0, %v270
  %v272 = vmul.f32 %v269, %v271
  %v273 = vadd.f32 %v269, %v272
  %vm274 = vweird.f32 %v268
  %vm275 = vweird.f32 %v269
  %vm276 = vmor %vm274, %vm275
  %v277 = vsel %vm276, %v269, %v273
  %v278 = vand.u32 2147483647, %v268
  %vm279 = vcmp.eq.f32.partialorder %v278, 8.507059e+37
  %v280 = vand.u32 %v268, 2147483648
  %v281 = vor.u32 1.1754944e-38, %v280
  %v282 = vsel %vm279, %v281, %v277
  %v283 = vmul.f32 %v233, %v282
  %v284 = vld [vmem:[%s5] sm:$0x1]
  %v286 = vperm.slane %v284, 0
  %v288 = vmul.f32 %v283, %v286
  %v289 = vld [vmem:[%s6] sm:$0x1]
  %v291 = vperm.slane %v289, 0
  %v293 = vadd.f32 %v288, %v291
  %294 = vst [vmem:[%s7] sm:$0xff] %v293
  // Predicated region
  $region30: #{transformer_first_encoder_layer.1} parent=0 // pred_check
    _
  $region31: #{transformer_first_encoder_layer.1} parent=0 // pred_check_branch
    %296 = sbr.rel (0) target = $region33
  $region32: #{transformer_first_encoder_layer.1} parent=0 // pred_region
    _
  $region33: #{transformer_first_encoder_layer.1} parent=0 // pred_fallthru
    _
  // Predicated region
  $region34: #{transformer_first_encoder_layer.1} parent=0 // pred_check
    _
  $region35: #{transformer_first_encoder_layer.1} parent=0 // pred_check_branch
    %298 = sbr.rel (0) target = $region37
  $region36: #{transformer_first_encoder_layer.1} parent=0 // pred_region
    _
  $region37: #{transformer_first_encoder_layer.1} parent=0 // pred_fallthru
    _

</llo_original>
